<compile_context>
chip_gen: v6e
topology: v6e:2x2x1
jax: 0.10.0
libtpu: 0.0.40
codegen_flags: <defaults>
</compile_context>

<pallas_src>
import jax
import jax.numpy as jnp
from jax.experimental import pallas as pl
from jax.experimental.pallas import tpu as pltpu

GAME_BOARD_SIZE = 16
H = 400          # hidden width of fc1 / fc3
Z = 20           # latent dim
OUT_W = 64       # packed output slab: [0:16) recon, [16:36) mu, [36:56) logvar, [56:64) pad


def _round_up(n, m):
    return pl.cdiv(n, m) * m


def vae_forward_kernel(
    x_ref, eps_ref,
    w1_ref, b1_ref,
    wh_ref, bh_ref,      # fused mu/logvar head: [400, 40], [1, 40]
    w3_ref, b3_ref,
    w4_ref, b4_ref,
    out_ref,             # [TB, 64] packed output slab
):
    x = x_ref[...]                       # [TB, 16] f32
    eps = eps_ref[...]                   # [TB, 20] f32

    # encode: h1 = relu(x @ W1 + b1)   (bf16 operands, f32 accumulation)
    h1 = jnp.dot(x.astype(jnp.bfloat16), w1_ref[...],
                 preferred_element_type=jnp.float32) + b1_ref[...]
    h1 = jnp.maximum(h1, 0.0)            # [TB, 400] f32

    # fused heads: [mu | logvar] = h1 @ [W21 | W22] + [b21 | b22]
    head = jnp.dot(h1.astype(jnp.bfloat16), wh_ref[...],
                   preferred_element_type=jnp.float32) + bh_ref[...]   # [TB, 40] f32
    mu = head[:, :Z]
    logvar = head[:, Z:2 * Z]

    # reparameterize: z = eps * exp(0.5 * logvar) + mu   (all f32)
    std = jnp.exp(0.5 * logvar)
    z = eps * std + mu                   # [TB, 20] f32

    # decode: h3 = relu(z @ W3 + b3); recon = sigmoid(h3 @ W4 + b4)
    h3 = jnp.dot(z.astype(jnp.bfloat16), w3_ref[...],
                 preferred_element_type=jnp.float32) + b3_ref[...]
    h3 = jnp.maximum(h3, 0.0)            # [TB, 400] f32
    logits = jnp.dot(h3.astype(jnp.bfloat16), w4_ref[...],
                     preferred_element_type=jnp.float32) + b4_ref[...]   # [TB, 16] f32
    # sigmoid: exp on EUP, approximate reciprocal also on EUP (frees VALU slots)
    recon = pl.reciprocal(1.0 + jnp.exp(-logits), approx=True)

    tb = x.shape[0]
    pad = jnp.zeros((tb, OUT_W - GAME_BOARD_SIZE - 2 * Z), jnp.float32)
    out_ref[...] = jnp.concatenate([recon, head, pad], axis=-1)


def vae_forward(x, eps, params, tb=512):
    """x: [B, 16] f32, eps: [B, 20] f32 (the torch.randn_like sample).

    Returns (recon [B,16], mu [B,20], logvar [B,20]) as f32.
    """
    B = x.shape[0]
    # Batch tile: multiple of 8 (f32 sublane); bounded so h1/h3 scratch stays
    # small even under v7x's 64 MiB physical / 32 MiB scoped VMEM.
    TB = int(min(tb, _round_up(B, 8)))
    Bp = int(_round_up(B, TB))
    if Bp != B:
        x = jnp.pad(x, ((0, Bp - B), (0, 0)))
        eps = jnp.pad(eps, ((0, Bp - B), (0, 0)))

    def batch_spec(feat):
        return pl.BlockSpec((TB, feat), lambda i: (i, 0))

    def resident_spec(arr):
        # Full-array block, constant block index -> stays in VMEM across grid steps.
        return pl.BlockSpec(arr.shape, lambda i: (0, 0))

    args = (
        x, eps,
        params["w1"], params["b1"],
        params["w_head"], params["b_head"],
        params["w3"], params["b3"],
        params["w4"], params["b4"],
    )
    in_specs = [
        batch_spec(GAME_BOARD_SIZE),        # x
        batch_spec(Z),                      # eps
    ] + [resident_spec(a) for a in args[2:]]

    out = pl.pallas_call(
        vae_forward_kernel,
        out_shape=jax.ShapeDtypeStruct((Bp, OUT_W), jnp.float32),
        grid=(Bp // TB,),
        in_specs=in_specs,
        out_specs=batch_spec(OUT_W),
        compiler_params=pltpu.CompilerParams(
            dimension_semantics=("parallel",),   # shard batch tiles across TCs (v7x)
        ),
    )(*args)

    recon = out[:B, :GAME_BOARD_SIZE]
    mu = out[:B, GAME_BOARD_SIZE:GAME_BOARD_SIZE + Z]
    logvar = out[:B, GAME_BOARD_SIZE + Z:GAME_BOARD_SIZE + 2 * Z]
    return recon, mu, logvar


def init_params(key):
    """PyTorch-Linear-style init U(-1/sqrt(in), 1/sqrt(in)); weights stored bf16."""
    def linear(key, fan_in, fan_out):
        kw, kb = jax.random.split(key)
        bound = 1.0 / jnp.sqrt(jnp.float32(fan_in))
        w = jax.random.uniform(kw, (fan_in, fan_out), jnp.float32, -bound, bound)
        b = jax.random.uniform(kb, (1, fan_out), jnp.float32, -bound, bound)
        return w.astype(jnp.bfloat16), b   # bf16 weights, f32 biases

    k1, k21, k22, k3, k4 = jax.random.split(key, 5)
    w1, b1 = linear(k1, GAME_BOARD_SIZE, H)
    w21, b21 = linear(k21, H, Z)
    w22, b22 = linear(k22, H, Z)
    w3, b3 = linear(k3, Z, H)
    w4, b4 = linear(k4, H, GAME_BOARD_SIZE)
    # Fuse the two encoder heads into one [400, 40] matmul.
    w_head = jnp.concatenate([w21, w22], axis=1)
    b_head = jnp.concatenate([b21, b22], axis=1)
    return dict(w1=w1, b1=b1, w_head=w_head, b_head=b_head,
                w3=w3, b3=b3, w4=w4, b4=b4)


def vae_forward_ref(x, eps, p):
    """Pure-JAX reference matching the kernel's bf16-weight / f32-accum math."""
    def mm(a, w):
        return jnp.dot(a.astype(jnp.bfloat16), w, preferred_element_type=jnp.float32)
    h1 = jax.nn.relu(mm(x, p["w1"]) + p["b1"])
    head = mm(h1, p["w_head"]) + p["b_head"]
    mu, logvar = head[:, :Z], head[:, Z:2 * Z]
    z = eps * jnp.exp(0.5 * logvar) + mu
    h3 = jax.nn.relu(mm(z, p["w3"]) + p["b3"])
    recon = jax.nn.sigmoid(mm(h3, p["w4"]) + p["b4"])
    return recon, mu, logvar


if __name__ == "__main__":
    key = jax.random.PRNGKey(0)
    kp, kx, ke = jax.random.split(key, 3)
    params = init_params(kp)

    # Module accepts any shape and flattens to (-1, 16); feed it pre-flattened.
    B = 8
    x = jax.random.uniform(kx, (B, GAME_BOARD_SIZE), jnp.float32)
    eps = jax.random.normal(ke, (B, Z), jnp.float32)  # torch.randn_like(std)

    recon, mu, logvar = vae_forward(x, eps, params)
    jax.block_until_ready((recon, mu, logvar))

    r_ref, m_ref, lv_ref = vae_forward_ref(x, eps, params)
    # approx reciprocal in the sigmoid -> slightly looser tolerance on recon
    assert jnp.allclose(recon, r_ref, atol=2e-3, rtol=2e-3)
    assert jnp.allclose(mu, m_ref, atol=1e-3, rtol=1e-3)
    assert jnp.allclose(logvar, lv_ref, atol=1e-3, rtol=1e-3)

    # Exercise the multi-step grid + batch-padding path (B not a tile multiple).
    B2 = 12
    x2 = jax.random.uniform(kx, (B2, GAME_BOARD_SIZE), jnp.float32)
    eps2 = jax.random.normal(ke, (B2, Z), jnp.float32)
    r2, m2, lv2 = vae_forward(x2, eps2, params, tb=8)
    jax.block_until_ready((r2, m2, lv2))
    r2r, m2r, lv2r = vae_forward_ref(x2, eps2, params)
    assert jnp.allclose(r2, r2r, atol=2e-3, rtol=2e-3)
    assert jnp.allclose(m2, m2r, atol=1e-3, rtol=1e-3)
    assert jnp.allclose(lv2, lv2r, atol=1e-3, rtol=1e-3)

    print("KERNEL_OK")
</pallas_src>

<mosaic_0001>
module attributes {stable_mosaic.version = 11 : i64} {
  func.func @vae_forward_kernel(%arg0: i32, %arg1: memref<8x16xf32, #tpu.memory_space<vmem>>, %arg2: memref<8x20xf32, #tpu.memory_space<vmem>>, %arg3: memref<16x400xbf16, #tpu.memory_space<vmem>>, %arg4: memref<1x400xf32, #tpu.memory_space<vmem>>, %arg5: memref<400x40xbf16, #tpu.memory_space<vmem>>, %arg6: memref<1x40xf32, #tpu.memory_space<vmem>>, %arg7: memref<20x400xbf16, #tpu.memory_space<vmem>>, %arg8: memref<1x400xf32, #tpu.memory_space<vmem>>, %arg9: memref<400x16xbf16, #tpu.memory_space<vmem>>, %arg10: memref<1x16xf32, #tpu.memory_space<vmem>>, %arg11: memref<8x64xf32, #tpu.memory_space<vmem>>) attributes {dimension_semantics = [#tpu.dimension_semantics<parallel>], iteration_bounds = array<i64: 1>, scalar_prefetch = 0 : i64, scratch_operands = 0 : i64, tpu.core_type = #tpu.core_type<tc>, window_params = [{transform_indices = @transform_0, window_bounds = array<i64: 8, 16>}, {transform_indices = @transform_1, window_bounds = array<i64: 8, 20>}, {pipeline_mode = #tpu.pipeline_mode<synchronous>, transform_indices = @transform_2, window_bounds = array<i64: 16, 400>}, {pipeline_mode = #tpu.pipeline_mode<synchronous>, transform_indices = @transform_3, window_bounds = array<i64: 1, 400>}, {pipeline_mode = #tpu.pipeline_mode<synchronous>, transform_indices = @transform_4, window_bounds = array<i64: 400, 40>}, {pipeline_mode = #tpu.pipeline_mode<synchronous>, transform_indices = @transform_5, window_bounds = array<i64: 1, 40>}, {pipeline_mode = #tpu.pipeline_mode<synchronous>, transform_indices = @transform_6, window_bounds = array<i64: 20, 400>}, {pipeline_mode = #tpu.pipeline_mode<synchronous>, transform_indices = @transform_7, window_bounds = array<i64: 1, 400>}, {pipeline_mode = #tpu.pipeline_mode<synchronous>, transform_indices = @transform_8, window_bounds = array<i64: 400, 16>}, {pipeline_mode = #tpu.pipeline_mode<synchronous>, transform_indices = @transform_9, window_bounds = array<i64: 1, 16>}, {transform_indices = @transform_10, window_bounds = array<i64: 8, 64>}]} {
    %c0 = arith.constant 0 : index
    %c0_0 = arith.constant 0 : index
    %0 = vector.load %arg1[%c0, %c0_0] : memref<8x16xf32, #tpu.memory_space<vmem>>, vector<8x16xf32>
    %c0_1 = arith.constant 0 : index
    %c0_2 = arith.constant 0 : index
    %1 = vector.load %arg2[%c0_1, %c0_2] : memref<8x20xf32, #tpu.memory_space<vmem>>, vector<8x20xf32>
    %2 = arith.truncf %0 : vector<8x16xf32> to vector<8x16xbf16>
    %c0_3 = arith.constant 0 : index
    %c0_4 = arith.constant 0 : index
    %3 = vector.load %arg3[%c0_3, %c0_4] : memref<16x400xbf16, #tpu.memory_space<vmem>>, vector<16x400xbf16>
    %cst = arith.constant dense<0.000000e+00> : vector<8x400xf32>
    %4 = tpu.matmul %2, %3, %cst {dimension_numbers = #tpu.dot_dimension_numbers<[1], [0], [0], [1], [0, 0, 1, 1], [], []>} : vector<8x16xbf16>, vector<16x400xbf16>, vector<8x400xf32> -> vector<8x400xf32>
    %c0_5 = arith.constant 0 : index
    %c0_6 = arith.constant 0 : index
    %5 = vector.load %arg4[%c0_5, %c0_6] : memref<1x400xf32, #tpu.memory_space<vmem>>, vector<1x400xf32>
    %6 = vector.broadcast %5 : vector<1x400xf32> to vector<8x400xf32>
    %7 = arith.addf %4, %6 : vector<8x400xf32>
    %cst_7 = arith.constant 0.000000e+00 : f32
    %8 = vector.broadcast %cst_7 : f32 to vector<8x400xf32>
    %9 = arith.maximumf %7, %8 : vector<8x400xf32>
    %10 = arith.truncf %9 : vector<8x400xf32> to vector<8x400xbf16>
    %c0_8 = arith.constant 0 : index
    %c0_9 = arith.constant 0 : index
    %11 = vector.load %arg5[%c0_8, %c0_9] : memref<400x40xbf16, #tpu.memory_space<vmem>>, vector<400x40xbf16>
    %cst_10 = arith.constant dense<0.000000e+00> : vector<8x40xf32>
    %12 = tpu.matmul %10, %11, %cst_10 {dimension_numbers = #tpu.dot_dimension_numbers<[1], [0], [0], [1], [0, 0, 1, 1], [], []>} : vector<8x400xbf16>, vector<400x40xbf16>, vector<8x40xf32> -> vector<8x40xf32>
    %c0_11 = arith.constant 0 : index
    %c0_12 = arith.constant 0 : index
    %13 = vector.load %arg6[%c0_11, %c0_12] : memref<1x40xf32, #tpu.memory_space<vmem>>, vector<1x40xf32>
    %14 = vector.broadcast %13 : vector<1x40xf32> to vector<8x40xf32>
    %15 = arith.addf %12, %14 : vector<8x40xf32>
    %16 = vector.extract_strided_slice %15 {offsets = [0, 0], sizes = [8, 20], strides = [1, 1]} : vector<8x40xf32> to vector<8x20xf32>
    %17 = vector.extract_strided_slice %15 {offsets = [0, 20], sizes = [8, 20], strides = [1, 1]} : vector<8x40xf32> to vector<8x20xf32>
    %cst_13 = arith.constant 5.000000e-01 : f32
    %18 = vector.broadcast %cst_13 : f32 to vector<8x20xf32>
    %19 = arith.mulf %18, %17 : vector<8x20xf32>
    %20 = math.exp %19 : vector<8x20xf32>
    %21 = arith.mulf %1, %20 : vector<8x20xf32>
    %22 = arith.addf %21, %16 : vector<8x20xf32>
    %23 = arith.truncf %22 : vector<8x20xf32> to vector<8x20xbf16>
    %c0_14 = arith.constant 0 : index
    %c0_15 = arith.constant 0 : index
    %24 = vector.load %arg7[%c0_14, %c0_15] : memref<20x400xbf16, #tpu.memory_space<vmem>>, vector<20x400xbf16>
    %cst_16 = arith.constant dense<0.000000e+00> : vector<8x400xf32>
    %25 = tpu.matmul %23, %24, %cst_16 {dimension_numbers = #tpu.dot_dimension_numbers<[1], [0], [0], [1], [0, 0, 1, 1], [], []>} : vector<8x20xbf16>, vector<20x400xbf16>, vector<8x400xf32> -> vector<8x400xf32>
    %c0_17 = arith.constant 0 : index
    %c0_18 = arith.constant 0 : index
    %26 = vector.load %arg8[%c0_17, %c0_18] : memref<1x400xf32, #tpu.memory_space<vmem>>, vector<1x400xf32>
    %27 = vector.broadcast %26 : vector<1x400xf32> to vector<8x400xf32>
    %28 = arith.addf %25, %27 : vector<8x400xf32>
    %cst_19 = arith.constant 0.000000e+00 : f32
    %29 = vector.broadcast %cst_19 : f32 to vector<8x400xf32>
    %30 = arith.maximumf %28, %29 : vector<8x400xf32>
    %31 = arith.truncf %30 : vector<8x400xf32> to vector<8x400xbf16>
    %c0_20 = arith.constant 0 : index
    %c0_21 = arith.constant 0 : index
    %32 = vector.load %arg9[%c0_20, %c0_21] : memref<400x16xbf16, #tpu.memory_space<vmem>>, vector<400x16xbf16>
    %cst_22 = arith.constant dense<0.000000e+00> : vector<8x16xf32>
    %33 = tpu.matmul %31, %32, %cst_22 {dimension_numbers = #tpu.dot_dimension_numbers<[1], [0], [0], [1], [0, 0, 1, 1], [], []>} : vector<8x400xbf16>, vector<400x16xbf16>, vector<8x16xf32> -> vector<8x16xf32>
    %c0_23 = arith.constant 0 : index
    %c0_24 = arith.constant 0 : index
    %34 = vector.load %arg10[%c0_23, %c0_24] : memref<1x16xf32, #tpu.memory_space<vmem>>, vector<1x16xf32>
    %35 = vector.broadcast %34 : vector<1x16xf32> to vector<8x16xf32>
    %36 = arith.addf %33, %35 : vector<8x16xf32>
    %cst_25 = arith.constant 0.000000e+00 : f32
    %37 = vector.broadcast %cst_25 : f32 to vector<8x16xf32>
    %38 = arith.subf %37, %36 : vector<8x16xf32>
    %39 = math.exp %38 : vector<8x16xf32>
    %cst_26 = arith.constant 1.000000e+00 : f32
    %40 = vector.broadcast %cst_26 : f32 to vector<8x16xf32>
    %41 = arith.addf %40, %39 : vector<8x16xf32>
    %42 = tpu.reciprocal %41 {approx = true} : vector<8x16xf32> -> vector<8x16xf32>
    %cst_27 = arith.constant 0.000000e+00 : f32
    %43 = vector.broadcast %cst_27 : f32 to vector<8x8xf32>
    %44 = tpu.concatenate %42, %15, %43 in 1 : vector<8x16xf32>, vector<8x40xf32>, vector<8x8xf32> -> vector<8x64xf32>
    %c0_28 = arith.constant 0 : index
    %c0_29 = arith.constant 0 : index
    %45 = vector.load %arg11[%c0_28, %c0_29] : memref<8x64xf32, #tpu.memory_space<vmem>>, vector<8x64xf32>
    tpu.vector_store %arg11[%c0_28, %c0_29], %44 {strides = array<i32>} : memref<8x64xf32, #tpu.memory_space<vmem>>, vector<8x64xf32>,
    return
  }
  func.func @transform_0(%arg0: i32) -> (i32, i32) {
    %c0_i32 = arith.constant 0 : i32
    %c0_i32_0 = arith.constant 0 : i32
    return %arg0, %c0_i32 : i32, i32
  }
  func.func @transform_1(%arg0: i32) -> (i32, i32) {
    %c0_i32 = arith.constant 0 : i32
    %c0_i32_0 = arith.constant 0 : i32
    return %arg0, %c0_i32 : i32, i32
  }
  func.func @transform_2(%arg0: i32) -> (i32, i32) {
    %c0_i32 = arith.constant 0 : i32
    %c0_i32_0 = arith.constant 0 : i32
    %c0_i32_1 = arith.constant 0 : i32
    return %c0_i32, %c0_i32_0 : i32, i32
  }
  func.func @transform_3(%arg0: i32) -> (i32, i32) {
    %c0_i32 = arith.constant 0 : i32
    %c0_i32_0 = arith.constant 0 : i32
    %c0_i32_1 = arith.constant 0 : i32
    return %c0_i32, %c0_i32_0 : i32, i32
  }
  func.func @transform_4(%arg0: i32) -> (i32, i32) {
    %c0_i32 = arith.constant 0 : i32
    %c0_i32_0 = arith.constant 0 : i32
    %c0_i32_1 = arith.constant 0 : i32
    return %c0_i32, %c0_i32_0 : i32, i32
  }
  func.func @transform_5(%arg0: i32) -> (i32, i32) {
    %c0_i32 = arith.constant 0 : i32
    %c0_i32_0 = arith.constant 0 : i32
    %c0_i32_1 = arith.constant 0 : i32
    return %c0_i32, %c0_i32_0 : i32, i32
  }
  func.func @transform_6(%arg0: i32) -> (i32, i32) {
    %c0_i32 = arith.constant 0 : i32
    %c0_i32_0 = arith.constant 0 : i32
    %c0_i32_1 = arith.constant 0 : i32
    return %c0_i32, %c0_i32_0 : i32, i32
  }
  func.func @transform_7(%arg0: i32) -> (i32, i32) {
    %c0_i32 = arith.constant 0 : i32
    %c0_i32_0 = arith.constant 0 : i32
    %c0_i32_1 = arith.constant 0 : i32
    return %c0_i32, %c0_i32_0 : i32, i32
  }
  func.func @transform_8(%arg0: i32) -> (i32, i32) {
    %c0_i32 = arith.constant 0 : i32
    %c0_i32_0 = arith.constant 0 : i32
    %c0_i32_1 = arith.constant 0 : i32
    return %c0_i32, %c0_i32_0 : i32, i32
  }
  func.func @transform_9(%arg0: i32) -> (i32, i32) {
    %c0_i32 = arith.constant 0 : i32
    %c0_i32_0 = arith.constant 0 : i32
    %c0_i32_1 = arith.constant 0 : i32
    return %c0_i32, %c0_i32_0 : i32, i32
  }
  func.func @transform_10(%arg0: i32) -> (i32, i32) {
    %c0_i32 = arith.constant 0 : i32
    %c0_i32_0 = arith.constant 0 : i32
    return %arg0, %c0_i32 : i32, i32
  }
}

</mosaic_0001>

<llo_original>
// kernel: tpu_custom_call.1
$region0: #{tpu_custom_call.1}
  #allocation0 [shape = 'u32[]', space=smem, size = 0x4, offset = 0x4, fixed_abs, tag = 'smem constant byte address 0x4 - core index']
  #allocation1 [shape = 'u32[144,128]{1,0:T(1,128)}', space=vmem, size = 0x12000, scoped, tag = 'internal scratch']
  %s0 = inlined_call_operand.vmem [shape: f32[8,16], index: 0, kind: input, shape index: {}]
  %s1 = inlined_call_operand.vmem [shape: f32[8,20], index: 1, kind: input, shape index: {}]
  %s2 = inlined_call_operand.vmem [shape: bf16[16,400], index: 2, kind: input, shape index: {}]
  %s3 = inlined_call_operand.vmem [shape: f32[1,400], index: 3, kind: input, shape index: {}]
  %s4 = inlined_call_operand.vmem [shape: bf16[400,40], index: 4, kind: input, shape index: {}]
  %s5 = inlined_call_operand.vmem [shape: f32[1,40], index: 5, kind: input, shape index: {}]
  %s6 = inlined_call_operand.vmem [shape: bf16[20,400], index: 6, kind: input, shape index: {}]
  %s7 = inlined_call_operand.vmem [shape: f32[1,400], index: 7, kind: input, shape index: {}]
  %s8 = inlined_call_operand.vmem [shape: bf16[400,16], index: 8, kind: input, shape index: {}]
  %s9 = inlined_call_operand.vmem [shape: f32[1,16], index: 9, kind: input, shape index: {}]
  %s10 = inlined_call_operand.hbm [shape: f32[8,64], index: 10, kind: output, shape index: {}]
  %s11 = sld [smem:[#allocation0]]
  $region50: #{tpu_custom_call.1} parent=0
    _
  %s13 = ssub.s32 1, %s11
  %s14 = scalar_select 0, %s13, %s11
  $region1: #{tpu_custom_call.1} parent=0
    #allocation2 [shape = 'u8[4096]{0}', space=vmem, size = 0x1000, scoped, tag = 'output window, operand 0, single buffered']
    #allocation3 [shape = 's32[1]{0}', space=sflag, size = 0x4, scoped, tag = 'scoped memory for tpu_custom_call.1']
    %15 = vsyncpa [#allocation3], 0
    // Predicated region
    $region2: #{tpu_custom_call.1} parent=1 // pred_check
      _
    $region3: #{tpu_custom_call.1} parent=1 // pred_check_branch
      %17 = sbr.rel (0) target = $region5
    $region4: #{tpu_custom_call.1} parent=1 // pred_region
      _
    $region5: #{tpu_custom_call.1} parent=1 // pred_fallthru
      _
    // Predicated region
    $region6: #{tpu_custom_call.1} parent=1 // pred_check
      _
    $region7: #{tpu_custom_call.1} parent=1 // pred_check_branch
      %19 = sbr.rel (0) target = $region9
    $region8: #{tpu_custom_call.1} parent=1 // pred_region
      _
    $region9: #{tpu_custom_call.1} parent=1 // pred_fallthru
      _
    // Predicated region
    $region10: #{tpu_custom_call.1} parent=1 // pred_check
      _
    $region11: #{tpu_custom_call.1} parent=1 // pred_check_branch
      %21 = sbr.rel (0) target = $region13
    $region12: #{tpu_custom_call.1} parent=1 // pred_region
      _
    $region13: #{tpu_custom_call.1} parent=1 // pred_fallthru
      _
    // Predicated region
    $region14: #{tpu_custom_call.1} parent=1 // pred_check
      _
    $region15: #{tpu_custom_call.1} parent=1 // pred_check_branch
      %23 = sbr.rel (0) target = $region17
    $region16: #{tpu_custom_call.1} parent=1 // pred_region
      _
    $region17: #{tpu_custom_call.1} parent=1 // pred_fallthru
      _
    // Predicated region
    $region18: #{tpu_custom_call.1} parent=1 // pred_check
      _
    $region19: #{tpu_custom_call.1} parent=1 // pred_check_branch
      %25 = sbr.rel (0) target = $region21
    $region20: #{tpu_custom_call.1} parent=1 // pred_region
      _
    $region21: #{tpu_custom_call.1} parent=1 // pred_fallthru
      _
    // Predicated region
    $region22: #{tpu_custom_call.1} parent=1 // pred_check
      _
    $region23: #{tpu_custom_call.1} parent=1 // pred_check_branch
      %27 = sbr.rel (0) target = $region25
    $region24: #{tpu_custom_call.1} parent=1 // pred_region
      _
    $region25: #{tpu_custom_call.1} parent=1 // pred_fallthru
      _
    // Predicated region
    $region26: #{tpu_custom_call.1} parent=1 // pred_check
      _
    $region27: #{tpu_custom_call.1} parent=1 // pred_check_branch
      %29 = sbr.rel (0) target = $region29
    $region28: #{tpu_custom_call.1} parent=1 // pred_region
      _
    $region29: #{tpu_custom_call.1} parent=1 // pred_fallthru
      _
    // Predicated region
    $region30: #{tpu_custom_call.1} parent=1 // pred_check
      _
    $region31: #{tpu_custom_call.1} parent=1 // pred_check_branch
      %31 = sbr.rel (0) target = $region33
    $region32: #{tpu_custom_call.1} parent=1 // pred_region
      _
    $region33: #{tpu_custom_call.1} parent=1 // pred_fallthru
      _
    // Predicated region
    $region34: #{tpu_custom_call.1} parent=1 // pred_check
      _
    $region35: #{tpu_custom_call.1} parent=1 // pred_check_branch
      %33 = sbr.rel (0) target = $region37
    $region36: #{tpu_custom_call.1} parent=1 // pred_region
      _
    $region37: #{tpu_custom_call.1} parent=1 // pred_fallthru
      _
    // Predicated region
    $region38: #{tpu_custom_call.1} parent=1 // pred_check
      _
    $region39: #{tpu_custom_call.1} parent=1 // pred_check_branch
      %35 = sbr.rel (0) target = $region41
    $region40: #{tpu_custom_call.1} parent=1 // pred_region
      _
    $region41: #{tpu_custom_call.1} parent=1 // pred_fallthru
      _
    %v37 = vld [vmem:[%s0] sm:$0xff]
    %v38 = vld [vmem:[%s1] sm:$0xff]
    %v39 = vpack.c.bf16 %v37, %v37
    %v40 = vld [vmem:[%s2] sm:$0xff]
    %v41 = vld [vmem:[%s2 + $0x8] sm:$0xff]
    %v42 = vld [vmem:[%s2 + $0x10] sm:$0xff]
    %v43 = vld [vmem:[%s2 + $0x18] sm:$0xff]
    %v44 = vld [vmem:[%s3] sm:$0xf]
    %v46 = vlaneseq
    %v47 = vshrl.u32 %v46, 7
    %v48 = vsub.s32 0, %v47
    %v49 = vrot.slane %v44, %v48
    %v50 = vlaneseq
    %v51 = vshrl.u32 %v50, 7
    %v52 = vsub.s32 1, %v51
    %v53 = vrot.slane %v44, %v52
    %v54 = vlaneseq
    %v55 = vshrl.u32 %v54, 7
    %v56 = vsub.s32 2, %v55
    %v57 = vrot.slane %v44, %v56
    %v58 = vlaneseq
    %v59 = vshrl.u32 %v58, 7
    %v60 = vsub.s32 3, %v59
    %v61 = vrot.slane %v44, %v60
    %v70 = vunpack.c.l.b16 %v40
    %v71 = vunpack.c.h.b16 %v40
    %v72 = vunpack.c.l.b16 %v41
    %v73 = vunpack.c.h.b16 %v41
    %v74 = vunpack.c.l.b16 %v42
    %v75 = vunpack.c.h.b16 %v42
    %v76 = vunpack.c.l.b16 %v43
    %v77 = vunpack.c.h.b16 %v43
    %v78 = vpack.c.b16 %v74, %v70
    %v79 = vpack.c.b16 %v75, %v71
    %v80 = vpack.c.b16 %v76, %v72
    %v81 = vpack.c.b16 %v77, %v73
    %vm86 = vcmask 130048
    %v88 = vsel %vm86, %v39, 0
    %90 = vmatprep.subr.bf16.mxu0 0
    %91 = vmatpush1.bf16.msra.mxu0 0
    %92 = vmatprep.subr.bf16.mxu0 0
    %93 = vmatpush1.bf16.msra.mxu0 0
    %94 = vmatprep.subr.bf16.mxu0 0
    %95 = vmatpush1.bf16.msra.mxu0 0
    %96 = vmatprep.subr.bf16.mxu0 0
    %97 = vmatpush1.bf16.msra.mxu0 0
    %98 = vmatprep.subr.bf16.mxu0 0
    %99 = vmatpush1.bf16.msra.mxu0 0
    %100 = vmatprep.subr.bf16.mxu0 0
    %101 = vmatpush1.bf16.msra.mxu0 0
    %102 = vmatprep.subr.bf16.mxu0 0
    %103 = vmatpush1.bf16.msra.mxu0 0
    %104 = vmatprep.subr.bf16.mxu0 %v79
    %105 = vmatpush1.bf16.msra.mxu0 %v78
    %106 = vmatprep.subr.bf16.mxu0 0
    %107 = vmatpush2.bf16.msra.mxu0 0
    %108 = vmatprep.subr.bf16.mxu0 0
    %109 = vmatpush2.bf16.msra.mxu0 0
    %110 = vmatprep.subr.bf16.mxu0 0
    %111 = vmatpush2.bf16.msra.mxu0 0
    %112 = vmatprep.subr.bf16.mxu0 0
    %113 = vmatpush2.bf16.msra.mxu0 0
    %114 = vmatprep.subr.bf16.mxu0 0
    %115 = vmatpush2.bf16.msra.mxu0 0
    %116 = vmatprep.subr.bf16.mxu0 0
    %117 = vmatpush2.bf16.msra.mxu0 0
    %118 = vmatprep.subr.bf16.mxu0 0
    %119 = vmatpush2.bf16.msra.mxu0 0
    %120 = vmatprep.subr.bf16.mxu0 0
    %121 = vmatpush2.bf16.msra.mxu0 0
    %122 = vmatprep.mubr.bf16.mxu0 0
    %123 = vmatmul.mubr.bf16.gmra.mxu0 %v88
    %v124 = vpop.f32.mrf.mxu0
    %v125 = vadd.f32 %v49, %v124
    %v126 = vpop.f32.mrf.mxu0
    %v127 = vadd.f32 %v53, %v126
    %v128 = vpop.f32.mrf.mxu0
    %v129 = vpop.f32.mrf.mxu0
    %130 = vdwg.mxu0
    %131 = vmatprep.subr.bf16.mxu0 0
    %132 = vmatpush1.bf16.msra.mxu0 0
    %133 = vmatprep.subr.bf16.mxu0 0
    %134 = vmatpush1.bf16.msra.mxu0 0
    %135 = vmatprep.subr.bf16.mxu0 0
    %136 = vmatpush1.bf16.msra.mxu0 0
    %137 = vmatprep.subr.bf16.mxu0 0
    %138 = vmatpush1.bf16.msra.mxu0 0
    %139 = vmatprep.subr.bf16.mxu0 0
    %140 = vmatpush1.bf16.msra.mxu0 0
    %141 = vmatprep.subr.bf16.mxu0 0
    %142 = vmatpush1.bf16.msra.mxu0 0
    %143 = vmatprep.subr.bf16.mxu0 0
    %144 = vmatpush1.bf16.msra.mxu0 0
    %145 = vmatprep.subr.bf16.mxu0 %v81
    %146 = vmatpush1.bf16.msra.mxu0 %v80
    %147 = vmatprep.subr.bf16.mxu0 0
    %148 = vmatpush2.bf16.msra.mxu0 0
    %149 = vmatprep.subr.bf16.mxu0 0
    %150 = vmatpush2.bf16.msra.mxu0 0
    %151 = vmatprep.subr.bf16.mxu0 0
    %152 = vmatpush2.bf16.msra.mxu0 0
    %153 = vmatprep.subr.bf16.mxu0 0
    %154 = vmatpush2.bf16.msra.mxu0 0
    %155 = vmatprep.subr.bf16.mxu0 0
    %156 = vmatpush2.bf16.msra.mxu0 0
    %157 = vmatprep.subr.bf16.mxu0 0
    %158 = vmatpush2.bf16.msra.mxu0 0
    %159 = vmatprep.subr.bf16.mxu0 0
    %160 = vmatpush2.bf16.msra.mxu0 0
    %161 = vmatprep.subr.bf16.mxu0 0
    %162 = vmatpush2.bf16.msra.mxu0 0
    %163 = vmatprep.mubr.bf16.mxu0 0
    %164 = vmatmul.mubr.bf16.gmra.mxu0 %v88
    %v165 = vpop.f32.mrf.mxu0
    %v166 = vadd.f32 %v57, %v165
    %v167 = vpop.f32.mrf.mxu0
    %v168 = vadd.f32 %v61, %v167
    %v169 = vpop.f32.mrf.mxu0
    %v170 = vpop.f32.mrf.mxu0
    %171 = vdwg.mxu0
    %v172 = vmax.f32 %v125, 0.0
    %v173 = vmax.f32 %v127, 0.0
    %v174 = vmax.f32 %v166, 0.0
    %v175 = vmax.f32 %v168, 0.0
    %v176 = vpack.c.bf16 %v172, %v172
    %v177 = vpack.c.bf16 %v173, %v173
    %v178 = vpack.c.bf16 %v174, %v174
    %v179 = vpack.c.bf16 %v175, %v175
    %v180 = vld [vmem:[%s4] sm:$0xf]
    %v181 = vld [vmem:[%s4 + $0x4] sm:$0xf]
    %v182 = vld [vmem:[%s4 + $0x8] sm:$0xf]
    %v183 = vld [vmem:[%s4 + $0xc] sm:$0xf]
    %v184 = vld [vmem:[%s4 + $0x10] sm:$0xf]
    %v185 = vld [vmem:[%s4 + $0x14] sm:$0xf]
    %v186 = vld [vmem:[%s4 + $0x18] sm:$0xf]
    %v187 = vld [vmem:[%s4 + $0x1c] sm:$0xf]
    %v188 = vld [vmem:[%s4 + $0x20] sm:$0xf]
    %v189 = vld [vmem:[%s4 + $0x24] sm:$0xf]
    %v190 = vld [vmem:[%s4 + $0x28] sm:$0xf]
    %v191 = vld [vmem:[%s4 + $0x2c] sm:$0xf]
    %v192 = vld [vmem:[%s4 + $0x30] sm:$0xf]
    %v193 = vld [vmem:[%s4 + $0x34] sm:$0xf]
    %v194 = vld [vmem:[%s4 + $0x38] sm:$0xf]
    %v195 = vld [vmem:[%s4 + $0x3c] sm:$0xf]
    %v196 = vld [vmem:[%s4 + $0x40] sm:$0xf]
    %v197 = vld [vmem:[%s4 + $0x44] sm:$0xf]
    %v198 = vld [vmem:[%s4 + $0x48] sm:$0xf]
    %v199 = vld [vmem:[%s4 + $0x4c] sm:$0xf]
    %v200 = vld [vmem:[%s4 + $0x50] sm:$0xf]
    %v201 = vld [vmem:[%s4 + $0x54] sm:$0xf]
    %v202 = vld [vmem:[%s4 + $0x58] sm:$0xf]
    %v203 = vld [vmem:[%s4 + $0x5c] sm:$0xf]
    %v204 = vld [vmem:[%s4 + $0x60] sm:$0xf]
    %v205 = vld [vmem:[%s4 + $0x64] sm:$0xf]
    %v206 = vld [vmem:[%s4 + $0x68] sm:$0xf]
    %v207 = vld [vmem:[%s4 + $0x6c] sm:$0xf]
    %v208 = vld [vmem:[%s4 + $0x70] sm:$0xf]
    %v209 = vld [vmem:[%s4 + $0x74] sm:$0xf]
    %v210 = vld [vmem:[%s4 + $0x78] sm:$0xf]
    %v211 = vld [vmem:[%s4 + $0x7c] sm:$0xf]
    %v212 = vld [vmem:[%s4 + $0x80] sm:$0xf]
    %v213 = vld [vmem:[%s4 + $0x84] sm:$0xf]
    %v214 = vld [vmem:[%s4 + $0x88] sm:$0xf]
    %v215 = vld [vmem:[%s4 + $0x8c] sm:$0xf]
    %v216 = vld [vmem:[%s4 + $0x90] sm:$0xf]
    %v217 = vld [vmem:[%s4 + $0x94] sm:$0xf]
    %v218 = vld [vmem:[%s4 + $0x98] sm:$0xf]
    %v219 = vld [vmem:[%s4 + $0x9c] sm:$0xf]
    %v220 = vld [vmem:[%s4 + $0xa0] sm:$0xf]
    %v221 = vld [vmem:[%s4 + $0xa4] sm:$0xf]
    %v222 = vld [vmem:[%s4 + $0xa8] sm:$0xf]
    %v223 = vld [vmem:[%s4 + $0xac] sm:$0xf]
    %v224 = vld [vmem:[%s4 + $0xb0] sm:$0xf]
    %v225 = vld [vmem:[%s4 + $0xb4] sm:$0xf]
    %v226 = vld [vmem:[%s4 + $0xb8] sm:$0xf]
    %v227 = vld [vmem:[%s4 + $0xbc] sm:$0xf]
    %v228 = vld [vmem:[%s4 + $0xc0] sm:$0xf]
    %v229 = vld [vmem:[%s4 + $0xc4] sm:$0xf]
    %v230 = vld [vmem:[%s5] sm:$0x1]
    %v232 = vlaneseq
    %v233 = vshrl.u32 %v232, 7
    %v234 = vsub.s32 0, %v233
    %v235 = vrot.slane %v230, %v234
    %v287 = vunpack.c.l.b16 %v180
    %v288 = vunpack.c.l.b16 %v181
    %v289 = vunpack.c.l.b16 %v182
    %v290 = vunpack.c.l.b16 %v183
    %v291 = vunpack.c.l.b16 %v184
    %v292 = vunpack.c.l.b16 %v185
    %v293 = vunpack.c.l.b16 %v186
    %v294 = vunpack.c.l.b16 %v187
    %v295 = vunpack.c.l.b16 %v188
    %v296 = vunpack.c.l.b16 %v189
    %v297 = vunpack.c.l.b16 %v190
    %v298 = vunpack.c.l.b16 %v191
    %v299 = vunpack.c.l.b16 %v192
    %v300 = vunpack.c.l.b16 %v193
    %v301 = vunpack.c.l.b16 %v194
    %v302 = vunpack.c.l.b16 %v195
    %v303 = vunpack.c.l.b16 %v196
    %v304 = vunpack.c.l.b16 %v197
    %v305 = vunpack.c.l.b16 %v198
    %v306 = vunpack.c.l.b16 %v199
    %v307 = vunpack.c.l.b16 %v200
    %v308 = vunpack.c.l.b16 %v201
    %v309 = vunpack.c.l.b16 %v202
    %v310 = vunpack.c.l.b16 %v203
    %v311 = vunpack.c.l.b16 %v204
    %v312 = vunpack.c.l.b16 %v205
    %v313 = vunpack.c.l.b16 %v206
    %v314 = vunpack.c.l.b16 %v207
    %v315 = vunpack.c.l.b16 %v208
    %v316 = vunpack.c.l.b16 %v209
    %v317 = vunpack.c.l.b16 %v210
    %v318 = vunpack.c.l.b16 %v211
    %v319 = vunpack.c.l.b16 %v212
    %v320 = vunpack.c.l.b16 %v213
    %v321 = vunpack.c.l.b16 %v214
    %v322 = vunpack.c.l.b16 %v215
    %v323 = vunpack.c.l.b16 %v216
    %v324 = vunpack.c.l.b16 %v217
    %v325 = vunpack.c.l.b16 %v218
    %v326 = vunpack.c.l.b16 %v219
    %v327 = vunpack.c.l.b16 %v220
    %v328 = vunpack.c.l.b16 %v221
    %v329 = vunpack.c.l.b16 %v222
    %v330 = vunpack.c.l.b16 %v223
    %v331 = vunpack.c.l.b16 %v224
    %v332 = vunpack.c.l.b16 %v225
    %v333 = vunpack.c.l.b16 %v226
    %v334 = vunpack.c.l.b16 %v227
    %v335 = vunpack.c.l.b16 %v228
    %v336 = vunpack.c.l.b16 %v229
    %v337 = vpack.c.b16 %v288, %v287
    %v338 = vpack.c.b16 %v290, %v289
    %v339 = vpack.c.b16 %v292, %v291
    %v340 = vpack.c.b16 %v294, %v293
    %v341 = vpack.c.b16 %v296, %v295
    %v342 = vpack.c.b16 %v298, %v297
    %v343 = vpack.c.b16 %v300, %v299
    %v344 = vpack.c.b16 %v302, %v301
    %v345 = vpack.c.b16 %v304, %v303
    %v346 = vpack.c.b16 %v306, %v305
    %v347 = vpack.c.b16 %v308, %v307
    %v348 = vpack.c.b16 %v310, %v309
    %v349 = vpack.c.b16 %v312, %v311
    %v350 = vpack.c.b16 %v314, %v313
    %v351 = vpack.c.b16 %v316, %v315
    %v352 = vpack.c.b16 %v318, %v317
    %v353 = vpack.c.b16 %v320, %v319
    %v354 = vpack.c.b16 %v322, %v321
    %v355 = vpack.c.b16 %v324, %v323
    %v356 = vpack.c.b16 %v326, %v325
    %v357 = vpack.c.b16 %v328, %v327
    %v358 = vpack.c.b16 %v330, %v329
    %v359 = vpack.c.b16 %v332, %v331
    %v360 = vpack.c.b16 %v334, %v333
    %v361 = vpack.c.b16 %v336, %v335
    %v388 = vsel %vm86, %v179, 0
    %390 = vmatprep.subr.bf16.mxu0 0
    %391 = vmatpush1.bf16.msra.mxu0 %v344
    %392 = vmatprep.subr.bf16.mxu0 0
    %393 = vmatpush1.bf16.msra.mxu0 %v343
    %394 = vmatprep.subr.bf16.mxu0 0
    %395 = vmatpush1.bf16.msra.mxu0 %v342
    %396 = vmatprep.subr.bf16.mxu0 0
    %397 = vmatpush1.bf16.msra.mxu0 %v341
    %398 = vmatprep.subr.bf16.mxu0 0
    %399 = vmatpush1.bf16.msra.mxu0 %v340
    %400 = vmatprep.subr.bf16.mxu0 0
    %401 = vmatpush1.bf16.msra.mxu0 %v339
    %402 = vmatprep.subr.bf16.mxu0 0
    %403 = vmatpush1.bf16.msra.mxu0 %v338
    %404 = vmatprep.subr.bf16.mxu0 0
    %405 = vmatpush1.bf16.msra.mxu0 %v337
    %406 = vmatprep.subr.bf16.mxu0 0
    %407 = vmatpush2.bf16.msra.mxu0 %v352
    %408 = vmatprep.subr.bf16.mxu0 0
    %409 = vmatpush2.bf16.msra.mxu0 %v351
    %410 = vmatprep.subr.bf16.mxu0 0
    %411 = vmatpush2.bf16.msra.mxu0 %v350
    %412 = vmatprep.subr.bf16.mxu0 0
    %413 = vmatpush2.bf16.msra.mxu0 %v349
    %414 = vmatprep.subr.bf16.mxu0 0
    %415 = vmatpush2.bf16.msra.mxu0 %v348
    %416 = vmatprep.subr.bf16.mxu0 0
    %417 = vmatpush2.bf16.msra.mxu0 %v347
    %418 = vmatprep.subr.bf16.mxu0 0
    %419 = vmatpush2.bf16.msra.mxu0 %v346
    %420 = vmatprep.subr.bf16.mxu0 0
    %421 = vmatpush2.bf16.msra.mxu0 %v345
    %422 = vmatprep.mubr.bf16.mxu0 %v177
    %423 = vmatmul.mubr.bf16.gmra.mxu0 %v176
    %v424 = vpop.f32.mrf.mxu0
    %v425 = vadd.f32 %v235, %v424
    %v426 = vpop.f32.mrf.mxu0
    %v427 = vpop.f32.mrf.mxu0
    %v428 = vpop.f32.mrf.mxu0
    %429 = vdwg.mxu0
    %430 = vmatprep.subr.bf16.mxu0 0
    %431 = vmatpush1.bf16.msra.mxu0 %v360
    %432 = vmatprep.subr.bf16.mxu0 0
    %433 = vmatpush1.bf16.msra.mxu0 %v359
    %434 = vmatprep.subr.bf16.mxu0 0
    %435 = vmatpush1.bf16.msra.mxu0 %v358
    %436 = vmatprep.subr.bf16.mxu0 0
    %437 = vmatpush1.bf16.msra.mxu0 %v357
    %438 = vmatprep.subr.bf16.mxu0 0
    %439 = vmatpush1.bf16.msra.mxu0 %v356
    %440 = vmatprep.subr.bf16.mxu0 0
    %441 = vmatpush1.bf16.msra.mxu0 %v355
    %442 = vmatprep.subr.bf16.mxu0 0
    %443 = vmatpush1.bf16.msra.mxu0 %v354
    %444 = vmatprep.subr.bf16.mxu0 0
    %445 = vmatpush1.bf16.msra.mxu0 %v353
    %446 = vmatprep.subr.bf16.mxu0 0
    %447 = vmatpush2.bf16.msra.mxu0 0
    %448 = vmatprep.subr.bf16.mxu0 0
    %449 = vmatpush2.bf16.msra.mxu0 0
    %450 = vmatprep.subr.bf16.mxu0 0
    %451 = vmatpush2.bf16.msra.mxu0 0
    %452 = vmatprep.subr.bf16.mxu0 0
    %453 = vmatpush2.bf16.msra.mxu0 0
    %454 = vmatprep.subr.bf16.mxu0 0
    %455 = vmatpush2.bf16.msra.mxu0 0
    %456 = vmatprep.subr.bf16.mxu0 0
    %457 = vmatpush2.bf16.msra.mxu0 0
    %458 = vmatprep.subr.bf16.mxu0 0
    %459 = vmatpush2.bf16.msra.mxu0 0
    %460 = vmatprep.subr.bf16.mxu0 0
    %461 = vmatpush2.bf16.msra.mxu0 %v361
    %462 = vmatprep.mubr.bf16.mxu0 %v388
    %463 = vmatmul.mubr.bf16.gmra.mxu0 %v178
    %v464 = vpop.f32.mrf.mxu0
    %v465 = vadd.f32 %v425, %v464
    %v466 = vpop.f32.mrf.mxu0
    %v467 = vpop.f32.mrf.mxu0
    %v468 = vpop.f32.mrf.mxu0
    %469 = vdwg.mxu0
    %v470 = vmul.f32 %v465, 0.5
    %v471 = vmul.f32 %v470, 1.442695
    %v472 = vpow.pop %v471
    %474 = vrot.lane.b32.xlu0 %v472, 108
    %v475 = vpop.permute.xlu0 %474
    %v477 = vmul.f32 %v38, %v475
    %v478 = vadd.f32 %v477, %v465
    %v479 = vpack.c.bf16 %v478, %v478
    %v480 = vld [vmem:[%s6] sm:$0xff]
    %v481 = vld [vmem:[%s6 + $0x8] sm:$0xff]
    %v482 = vld [vmem:[%s6 + $0x10] sm:$0xff]
    %v483 = vld [vmem:[%s6 + $0x18] sm:$0xff]
    %v484 = vld [vmem:[%s6 + $0x20] sm:$0x33]
    %v485 = vld [vmem:[%s6 + $0x28] sm:$0x33]
    %v486 = vld [vmem:[%s7] sm:$0xf]
    %v488 = vlaneseq
    %v489 = vshrl.u32 %v488, 7
    %v490 = vsub.s32 0, %v489
    %v491 = vrot.slane %v486, %v490
    %v492 = vlaneseq
    %v493 = vshrl.u32 %v492, 7
    %v494 = vsub.s32 1, %v493
    %v495 = vrot.slane %v486, %v494
    %v496 = vlaneseq
    %v497 = vshrl.u32 %v496, 7
    %v498 = vsub.s32 2, %v497
    %v499 = vrot.slane %v486, %v498
    %v500 = vlaneseq
    %v501 = vshrl.u32 %v500, 7
    %v502 = vsub.s32 3, %v501
    %v503 = vrot.slane %v486, %v502
    %v514 = vunpack.c.l.b16 %v480
    %v515 = vunpack.c.h.b16 %v480
    %v516 = vunpack.c.l.b16 %v481
    %v517 = vunpack.c.h.b16 %v481
    %v518 = vunpack.c.l.b16 %v482
    %v519 = vunpack.c.h.b16 %v482
    %v520 = vunpack.c.l.b16 %v483
    %v521 = vunpack.c.h.b16 %v483
    %v522 = vunpack.c.l.b16 %v484
    %v523 = vunpack.c.h.b16 %v484
    %v524 = vunpack.c.l.b16 %v485
    %v525 = vunpack.c.h.b16 %v485
    %v526 = vpack.c.b16 %v518, %v514
    %v527 = vpack.c.b16 %v519, %v515
    %v528 = vpack.c.b16 %v520, %v516
    %v529 = vpack.c.b16 %v521, %v517
    %v530 = vpack.c.b16 %v522, %v522
    %v531 = vpack.c.b16 %v523, %v523
    %v532 = vpack.c.b16 %v524, %v524
    %v533 = vpack.c.b16 %v525, %v525
    %vm538 = vcmask 162816
    %v540 = vsel %vm538, %v479, 0
    %vm542 = vcmask 1041408
    %v544 = vsel %vm542, %v530, 0
    %v547 = vsel %vm542, %v531, 0
    %v550 = vsel %vm542, %v532, 0
    %v553 = vsel %vm542, %v533, 0
    %555 = vmatprep.subr.bf16.mxu0 0
    %556 = vmatpush1.bf16.msra.mxu0 0
    %557 = vmatprep.subr.bf16.mxu0 0
    %558 = vmatpush1.bf16.msra.mxu0 0
    %559 = vmatprep.subr.bf16.mxu0 0
    %560 = vmatpush1.bf16.msra.mxu0 0
    %561 = vmatprep.subr.bf16.mxu0 0
    %562 = vmatpush1.bf16.msra.mxu0 0
    %563 = vmatprep.subr.bf16.mxu0 0
    %564 = vmatpush1.bf16.msra.mxu0 0
    %565 = vmatprep.subr.bf16.mxu0 0
    %566 = vmatpush1.bf16.msra.mxu0 0
    %567 = vmatprep.subr.bf16.mxu0 %v547
    %568 = vmatpush1.bf16.msra.mxu0 %v544
    %569 = vmatprep.subr.bf16.mxu0 %v527
    %570 = vmatpush1.bf16.msra.mxu0 %v526
    %571 = vmatprep.subr.bf16.mxu0 0
    %572 = vmatpush2.bf16.msra.mxu0 0
    %573 = vmatprep.subr.bf16.mxu0 0
    %574 = vmatpush2.bf16.msra.mxu0 0
    %575 = vmatprep.subr.bf16.mxu0 0
    %576 = vmatpush2.bf16.msra.mxu0 0
    %577 = vmatprep.subr.bf16.mxu0 0
    %578 = vmatpush2.bf16.msra.mxu0 0
    %579 = vmatprep.subr.bf16.mxu0 0
    %580 = vmatpush2.bf16.msra.mxu0 0
    %581 = vmatprep.subr.bf16.mxu0 0
    %582 = vmatpush2.bf16.msra.mxu0 0
    %583 = vmatprep.subr.bf16.mxu0 0
    %584 = vmatpush2.bf16.msra.mxu0 0
    %585 = vmatprep.subr.bf16.mxu0 0
    %586 = vmatpush2.bf16.msra.mxu0 0
    %587 = vmatprep.mubr.bf16.mxu0 0
    %588 = vmatmul.mubr.bf16.gmra.mxu0 %v540
    %v589 = vpop.f32.mrf.mxu0
    %v590 = vadd.f32 %v491, %v589
    %v591 = vpop.f32.mrf.mxu0
    %v592 = vadd.f32 %v495, %v591
    %v593 = vpop.f32.mrf.mxu0
    %v594 = vpop.f32.mrf.mxu0
    %595 = vdwg.mxu0
    %596 = vmatprep.subr.bf16.mxu0 0
    %597 = vmatpush1.bf16.msra.mxu0 0
    %598 = vmatprep.subr.bf16.mxu0 0
    %599 = vmatpush1.bf16.msra.mxu0 0
    %600 = vmatprep.subr.bf16.mxu0 0
    %601 = vmatpush1.bf16.msra.mxu0 0
    %602 = vmatprep.subr.bf16.mxu0 0
    %603 = vmatpush1.bf16.msra.mxu0 0
    %604 = vmatprep.subr.bf16.mxu0 0
    %605 = vmatpush1.bf16.msra.mxu0 0
    %606 = vmatprep.subr.bf16.mxu0 0
    %607 = vmatpush1.bf16.msra.mxu0 0
    %608 = vmatprep.subr.bf16.mxu0 %v553
    %609 = vmatpush1.bf16.msra.mxu0 %v550
    %610 = vmatprep.subr.bf16.mxu0 %v529
    %611 = vmatpush1.bf16.msra.mxu0 %v528
    %612 = vmatprep.subr.bf16.mxu0 0
    %613 = vmatpush2.bf16.msra.mxu0 0
    %614 = vmatprep.subr.bf16.mxu0 0
    %615 = vmatpush2.bf16.msra.mxu0 0
    %616 = vmatprep.subr.bf16.mxu0 0
    %617 = vmatpush2.bf16.msra.mxu0 0
    %618 = vmatprep.subr.bf16.mxu0 0
    %619 = vmatpush2.bf16.msra.mxu0 0
    %620 = vmatprep.subr.bf16.mxu0 0
    %621 = vmatpush2.bf16.msra.mxu0 0
    %622 = vmatprep.subr.bf16.mxu0 0
    %623 = vmatpush2.bf16.msra.mxu0 0
    %624 = vmatprep.subr.bf16.mxu0 0
    %625 = vmatpush2.bf16.msra.mxu0 0
    %626 = vmatprep.subr.bf16.mxu0 0
    %627 = vmatpush2.bf16.msra.mxu0 0
    %628 = vmatprep.mubr.bf16.mxu0 0
    %629 = vmatmul.mubr.bf16.gmra.mxu0 %v540
    %v630 = vpop.f32.mrf.mxu0
    %v631 = vadd.f32 %v499, %v630
    %v632 = vpop.f32.mrf.mxu0
    %v633 = vadd.f32 %v503, %v632
    %v634 = vpop.f32.mrf.mxu0
    %v635 = vpop.f32.mrf.mxu0
    %636 = vdwg.mxu0
    %v637 = vmax.f32 %v590, 0.0
    %v638 = vmax.f32 %v592, 0.0
    %v639 = vmax.f32 %v631, 0.0
    %v640 = vmax.f32 %v633, 0.0
    %v641 = vpack.c.bf16 %v637, %v637
    %v642 = vpack.c.bf16 %v638, %v638
    %v643 = vpack.c.bf16 %v639, %v639
    %v644 = vpack.c.bf16 %v640, %v640
    %v645 = vld [vmem:[%s8] sm:$0xf]
    %v646 = vld [vmem:[%s8 + $0x4] sm:$0xf]
    %v647 = vld [vmem:[%s8 + $0x8] sm:$0xf]
    %v648 = vld [vmem:[%s8 + $0xc] sm:$0xf]
    %v649 = vld [vmem:[%s8 + $0x10] sm:$0xf]
    %v650 = vld [vmem:[%s8 + $0x14] sm:$0xf]
    %v651 = vld [vmem:[%s8 + $0x18] sm:$0xf]
    %v652 = vld [vmem:[%s8 + $0x1c] sm:$0xf]
    %v653 = vld [vmem:[%s8 + $0x20] sm:$0xf]
    %v654 = vld [vmem:[%s8 + $0x24] sm:$0xf]
    %v655 = vld [vmem:[%s8 + $0x28] sm:$0xf]
    %v656 = vld [vmem:[%s8 + $0x2c] sm:$0xf]
    %v657 = vld [vmem:[%s8 + $0x30] sm:$0xf]
    %v658 = vld [vmem:[%s8 + $0x34] sm:$0xf]
    %v659 = vld [vmem:[%s8 + $0x38] sm:$0xf]
    %v660 = vld [vmem:[%s8 + $0x3c] sm:$0xf]
    %v661 = vld [vmem:[%s8 + $0x40] sm:$0xf]
    %v662 = vld [vmem:[%s8 + $0x44] sm:$0xf]
    %v663 = vld [vmem:[%s8 + $0x48] sm:$0xf]
    %v664 = vld [vmem:[%s8 + $0x4c] sm:$0xf]
    %v665 = vld [vmem:[%s8 + $0x50] sm:$0xf]
    %v666 = vld [vmem:[%s8 + $0x54] sm:$0xf]
    %v667 = vld [vmem:[%s8 + $0x58] sm:$0xf]
    %v668 = vld [vmem:[%s8 + $0x5c] sm:$0xf]
    %v669 = vld [vmem:[%s8 + $0x60] sm:$0xf]
    %v670 = vld [vmem:[%s8 + $0x64] sm:$0xf]
    %v671 = vld [vmem:[%s8 + $0x68] sm:$0xf]
    %v672 = vld [vmem:[%s8 + $0x6c] sm:$0xf]
    %v673 = vld [vmem:[%s8 + $0x70] sm:$0xf]
    %v674 = vld [vmem:[%s8 + $0x74] sm:$0xf]
    %v675 = vld [vmem:[%s8 + $0x78] sm:$0xf]
    %v676 = vld [vmem:[%s8 + $0x7c] sm:$0xf]
    %v677 = vld [vmem:[%s8 + $0x80] sm:$0xf]
    %v678 = vld [vmem:[%s8 + $0x84] sm:$0xf]
    %v679 = vld [vmem:[%s8 + $0x88] sm:$0xf]
    %v680 = vld [vmem:[%s8 + $0x8c] sm:$0xf]
    %v681 = vld [vmem:[%s8 + $0x90] sm:$0xf]
    %v682 = vld [vmem:[%s8 + $0x94] sm:$0xf]
    %v683 = vld [vmem:[%s8 + $0x98] sm:$0xf]
    %v684 = vld [vmem:[%s8 + $0x9c] sm:$0xf]
    %v685 = vld [vmem:[%s8 + $0xa0] sm:$0xf]
    %v686 = vld [vmem:[%s8 + $0xa4] sm:$0xf]
    %v687 = vld [vmem:[%s8 + $0xa8] sm:$0xf]
    %v688 = vld [vmem:[%s8 + $0xac] sm:$0xf]
    %v689 = vld [vmem:[%s8 + $0xb0] sm:$0xf]
    %v690 = vld [vmem:[%s8 + $0xb4] sm:$0xf]
    %v691 = vld [vmem:[%s8 + $0xb8] sm:$0xf]
    %v692 = vld [vmem:[%s8 + $0xbc] sm:$0xf]
    %v693 = vld [vmem:[%s8 + $0xc0] sm:$0xf]
    %v694 = vld [vmem:[%s8 + $0xc4] sm:$0xf]
    %v695 = vld [vmem:[%s9] sm:$0x1]
    %v697 = vlaneseq
    %v698 = vshrl.u32 %v697, 7
    %v699 = vsub.s32 0, %v698
    %v700 = vrot.slane %v695, %v699
    %v752 = vunpack.c.l.b16 %v645
    %v753 = vunpack.c.l.b16 %v646
    %v754 = vunpack.c.l.b16 %v647
    %v755 = vunpack.c.l.b16 %v648
    %v756 = vunpack.c.l.b16 %v649
    %v757 = vunpack.c.l.b16 %v650
    %v758 = vunpack.c.l.b16 %v651
    %v759 = vunpack.c.l.b16 %v652
    %v760 = vunpack.c.l.b16 %v653
    %v761 = vunpack.c.l.b16 %v654
    %v762 = vunpack.c.l.b16 %v655
    %v763 = vunpack.c.l.b16 %v656
    %v764 = vunpack.c.l.b16 %v657
    %v765 = vunpack.c.l.b16 %v658
    %v766 = vunpack.c.l.b16 %v659
    %v767 = vunpack.c.l.b16 %v660
    %v768 = vunpack.c.l.b16 %v661
    %v769 = vunpack.c.l.b16 %v662
    %v770 = vunpack.c.l.b16 %v663
    %v771 = vunpack.c.l.b16 %v664
    %v772 = vunpack.c.l.b16 %v665
    %v773 = vunpack.c.l.b16 %v666
    %v774 = vunpack.c.l.b16 %v667
    %v775 = vunpack.c.l.b16 %v668
    %v776 = vunpack.c.l.b16 %v669
    %v777 = vunpack.c.l.b16 %v670
    %v778 = vunpack.c.l.b16 %v671
    %v779 = vunpack.c.l.b16 %v672
    %v780 = vunpack.c.l.b16 %v673
    %v781 = vunpack.c.l.b16 %v674
    %v782 = vunpack.c.l.b16 %v675
    %v783 = vunpack.c.l.b16 %v676
    %v784 = vunpack.c.l.b16 %v677
    %v785 = vunpack.c.l.b16 %v678
    %v786 = vunpack.c.l.b16 %v679
    %v787 = vunpack.c.l.b16 %v680
    %v788 = vunpack.c.l.b16 %v681
    %v789 = vunpack.c.l.b16 %v682
    %v790 = vunpack.c.l.b16 %v683
    %v791 = vunpack.c.l.b16 %v684
    %v792 = vunpack.c.l.b16 %v685
    %v793 = vunpack.c.l.b16 %v686
    %v794 = vunpack.c.l.b16 %v687
    %v795 = vunpack.c.l.b16 %v688
    %v796 = vunpack.c.l.b16 %v689
    %v797 = vunpack.c.l.b16 %v690
    %v798 = vunpack.c.l.b16 %v691
    %v799 = vunpack.c.l.b16 %v692
    %v800 = vunpack.c.l.b16 %v693
    %v801 = vunpack.c.l.b16 %v694
    %v802 = vpack.c.b16 %v753, %v752
    %v803 = vpack.c.b16 %v755, %v754
    %v804 = vpack.c.b16 %v757, %v756
    %v805 = vpack.c.b16 %v759, %v758
    %v806 = vpack.c.b16 %v761, %v760
    %v807 = vpack.c.b16 %v763, %v762
    %v808 = vpack.c.b16 %v765, %v764
    %v809 = vpack.c.b16 %v767, %v766
    %v810 = vpack.c.b16 %v769, %v768
    %v811 = vpack.c.b16 %v771, %v770
    %v812 = vpack.c.b16 %v773, %v772
    %v813 = vpack.c.b16 %v775, %v774
    %v814 = vpack.c.b16 %v777, %v776
    %v815 = vpack.c.b16 %v779, %v778
    %v816 = vpack.c.b16 %v781, %v780
    %v817 = vpack.c.b16 %v783, %v782
    %v818 = vpack.c.b16 %v785, %v784
    %v819 = vpack.c.b16 %v787, %v786
    %v820 = vpack.c.b16 %v789, %v788
    %v821 = vpack.c.b16 %v791, %v790
    %v822 = vpack.c.b16 %v793, %v792
    %v823 = vpack.c.b16 %v795, %v794
    %v824 = vpack.c.b16 %v797, %v796
    %v825 = vpack.c.b16 %v799, %v798
    %v826 = vpack.c.b16 %v801, %v800
    %v853 = vsel %vm86, %v644, 0
    %855 = vmatprep.subr.bf16.mxu0 0
    %856 = vmatpush1.bf16.msra.mxu0 %v809
    %857 = vmatprep.subr.bf16.mxu0 0
    %858 = vmatpush1.bf16.msra.mxu0 %v808
    %859 = vmatprep.subr.bf16.mxu0 0
    %860 = vmatpush1.bf16.msra.mxu0 %v807
    %861 = vmatprep.subr.bf16.mxu0 0
    %862 = vmatpush1.bf16.msra.mxu0 %v806
    %863 = vmatprep.subr.bf16.mxu0 0
    %864 = vmatpush1.bf16.msra.mxu0 %v805
    %865 = vmatprep.subr.bf16.mxu0 0
    %866 = vmatpush1.bf16.msra.mxu0 %v804
    %867 = vmatprep.subr.bf16.mxu0 0
    %868 = vmatpush1.bf16.msra.mxu0 %v803
    %869 = vmatprep.subr.bf16.mxu0 0
    %870 = vmatpush1.bf16.msra.mxu0 %v802
    %871 = vmatprep.subr.bf16.mxu0 0
    %872 = vmatpush2.bf16.msra.mxu0 %v817
    %873 = vmatprep.subr.bf16.mxu0 0
    %874 = vmatpush2.bf16.msra.mxu0 %v816
    %875 = vmatprep.subr.bf16.mxu0 0
    %876 = vmatpush2.bf16.msra.mxu0 %v815
    %877 = vmatprep.subr.bf16.mxu0 0
    %878 = vmatpush2.bf16.msra.mxu0 %v814
    %879 = vmatprep.subr.bf16.mxu0 0
    %880 = vmatpush2.bf16.msra.mxu0 %v813
    %881 = vmatprep.subr.bf16.mxu0 0
    %882 = vmatpush2.bf16.msra.mxu0 %v812
    %883 = vmatprep.subr.bf16.mxu0 0
    %884 = vmatpush2.bf16.msra.mxu0 %v811
    %885 = vmatprep.subr.bf16.mxu0 0
    %886 = vmatpush2.bf16.msra.mxu0 %v810
    %887 = vmatprep.mubr.bf16.mxu0 %v642
    %888 = vmatmul.mubr.bf16.gmra.mxu0 %v641
    %v889 = vpop.f32.mrf.mxu0
    %v890 = vadd.f32 %v700, %v889
    %v891 = vpop.f32.mrf.mxu0
    %v892 = vpop.f32.mrf.mxu0
    %v893 = vpop.f32.mrf.mxu0
    %894 = vdwg.mxu0
    %895 = vmatprep.subr.bf16.mxu0 0
    %896 = vmatpush1.bf16.msra.mxu0 %v825
    %897 = vmatprep.subr.bf16.mxu0 0
    %898 = vmatpush1.bf16.msra.mxu0 %v824
    %899 = vmatprep.subr.bf16.mxu0 0
    %900 = vmatpush1.bf16.msra.mxu0 %v823
    %901 = vmatprep.subr.bf16.mxu0 0
    %902 = vmatpush1.bf16.msra.mxu0 %v822
    %903 = vmatprep.subr.bf16.mxu0 0
    %904 = vmatpush1.bf16.msra.mxu0 %v821
    %905 = vmatprep.subr.bf16.mxu0 0
    %906 = vmatpush1.bf16.msra.mxu0 %v820
    %907 = vmatprep.subr.bf16.mxu0 0
    %908 = vmatpush1.bf16.msra.mxu0 %v819
    %909 = vmatprep.subr.bf16.mxu0 0
    %910 = vmatpush1.bf16.msra.mxu0 %v818
    %911 = vmatprep.subr.bf16.mxu0 0
    %912 = vmatpush2.bf16.msra.mxu0 0
    %913 = vmatprep.subr.bf16.mxu0 0
    %914 = vmatpush2.bf16.msra.mxu0 0
    %915 = vmatprep.subr.bf16.mxu0 0
    %916 = vmatpush2.bf16.msra.mxu0 0
    %917 = vmatprep.subr.bf16.mxu0 0
    %918 = vmatpush2.bf16.msra.mxu0 0
    %919 = vmatprep.subr.bf16.mxu0 0
    %920 = vmatpush2.bf16.msra.mxu0 0
    %921 = vmatprep.subr.bf16.mxu0 0
    %922 = vmatpush2.bf16.msra.mxu0 0
    %923 = vmatprep.subr.bf16.mxu0 0
    %924 = vmatpush2.bf16.msra.mxu0 0
    %925 = vmatprep.subr.bf16.mxu0 0
    %926 = vmatpush2.bf16.msra.mxu0 %v826
    %927 = vmatprep.mubr.bf16.mxu0 %v853
    %928 = vmatmul.mubr.bf16.gmra.mxu0 %v643
    %v929 = vpop.f32.mrf.mxu0
    %v930 = vadd.f32 %v890, %v929
    %v931 = vpop.f32.mrf.mxu0
    %v932 = vpop.f32.mrf.mxu0
    %v933 = vpop.f32.mrf.mxu0
    %934 = vdwg.mxu0
    %v935 = vsub.f32 0.0, %v930
    %v936 = vmul.f32 %v935, 1.442695
    %v937 = vpow.pop %v936
    %v938 = vadd.f32 %v937, 1.0
    %v939 = vrcp.pop %v938
    %941 = vrot.lane.b32.xlu0 %v465, 16
    %v942 = vpop.permute.xlu0 %941
    %v944 = vsel %vm86, %v939, %v942
    %vm945 = vcmask 457728
    %v946 = vsel %vm945, %v944, 0.0
    %vm947 = vcmask 523264
    %948 = vst.msk [vmem:[#allocation2] sm:$0xff] %vm947, %v946
    // Predicated region
    $region42: #{tpu_custom_call.1} parent=1 // pred_check
      _
    $region43: #{tpu_custom_call.1} parent=1 // pred_check_branch
      %950 = sbr.rel (0) target = $region45
    $region44: #{tpu_custom_call.1} parent=1 // pred_region
      %s952 = ssub.s32 128, 128
      %953 = vsyncadd [#allocation3], %s952
      %s955 = sshll.u32 [#allocation2], 4
      %s956 = int_to_ptr.vmem [resolvable:$true] %s955
      %958 = dma.vmem_to_hbm [thread:$0]  %s956, 128, %s10, [#allocation3]
    $region45: #{tpu_custom_call.1} parent=1 // pred_fallthru
      _
    // Predicated region
    $region46: #{tpu_custom_call.1} parent=1 // pred_check
      _
    $region47: #{tpu_custom_call.1} parent=1 // pred_check_branch
      %960 = sbr.rel (0) target = $region49
    $region48: #{tpu_custom_call.1} parent=1 // pred_region
      %961 = dma.done [#allocation3], 128
    $region49: #{tpu_custom_call.1} parent=1 // pred_fallthru
      _
    %962 = vsyncpa [#allocation3], 1

</llo_original>
